<compile_context>
chip_gen: v7x
topology: tpu7x:2x2x1
jax: 0.10.0
libtpu: 0.0.40
codegen_flags: <defaults>
</compile_context>

<pallas_src>
import functools

import jax
import jax.numpy as jnp
from jax import lax
from jax.experimental import pallas as pl
from jax.experimental.pallas import tpu as pltpu


def _num_parallel_cores():
    """2 on chips that expose two TensorCores to Pallas 'parallel' grid axes."""
    try:
        kind = jax.devices()[0].device_kind.lower()
    except Exception:
        return 1
    if "v7" in kind or "tpu7" in kind:
        return 2
    return 1


def _focal_ce_kernel(logits_ref, gt_ref, out_ref, acc_ref, *,
                     hw, sub_t, blk_per_part, n_blk):
    """Accumulates summed cross-entropy for one (part, image, pixel-block) tile.

    logits_ref: (1, C, SUB_T, 128)   native dtype
    gt_ref:     (1, 1, SUB_T, 128)   integer (native width)
    out_ref:    (1, SUB_T, 128)      f32 per-part partial sums
    acc_ref:    (SUB_T, 128)         f32 VMEM scratch accumulator
    """
    part = pl.program_id(0)     # "parallel" axis (2-way only on 2-TC chips)
    img = pl.program_id(1)      # image index (arbitrary)
    j = pl.program_id(2)        # pixel-block index within this part

    c = logits_ref.shape[1]

    # Each part's iteration sub-sequence starts at (img=0, j=0), both under
    # sequential execution and under megacore sharding of the part axis, so
    # this reset is per-part / per-core.
    @pl.when(jnp.logical_and(img == 0, j == 0))
    def _():
        acc_ref[...] = jnp.zeros_like(acc_ref)

    tgt = gt_ref[0, 0].astype(jnp.int32)                   # (SUB_T, 128)

    def cls(k):
        return logits_ref[0, k].astype(jnp.float32)        # (SUB_T, 128)

    # Numerically stable logsumexp over classes + target pick, as an unrolled
    # elementwise loop over C full-width slabs (no sublane reductions).
    m = cls(0)
    for k in range(1, c):
        m = jnp.maximum(m, cls(k))
    s = jnp.zeros_like(m)
    picked = jnp.zeros_like(m)
    for k in range(c):
        xk = cls(k)
        s = s + jnp.exp(xk - m)
        picked = picked + jnp.where(tgt == k, xk, 0.0)

    ce = m + jnp.log(s) - picked                            # (SUB_T, 128)

    # Logical (unclamped) pixel-block index; the index_map clamps the DMA.
    blk = part * blk_per_part + j

    # Interior blocks: accumulate directly (no masking work).
    @pl.when(blk < n_blk - 1)
    def _():
        acc_ref[...] = acc_ref[...] + ce

    # Boundary (or clamped over-range) blocks: mask pixels >= H*W.
    @pl.when(blk >= n_blk - 1)
    def _():
        sub_iota = lax.broadcasted_iota(jnp.int32, (sub_t, 128), 0)
        lane_iota = lax.broadcasted_iota(jnp.int32, (sub_t, 128), 1)
        pix = (blk * sub_t + sub_iota) * 128 + lane_iota
        acc_ref[...] = acc_ref[...] + jnp.where(pix < hw, ce, 0.0)

    # Write this part's partial sums only on its final grid step.
    @pl.when(jnp.logical_and(img == pl.num_programs(1) - 1,
                             j == pl.num_programs(2) - 1))
    def _():
        out_ref[0] = acc_ref[...]


def focal_loss(pr, gt, alpha=0.5, gamma=2, target_block_bytes=2 * 1024 * 1024):
    """pr: (N, C, H, W) logits (any float dtype); gt: (N, H, W) int classes."""
    n, c, h, w = pr.shape
    hw = h * w
    lane = 128
    itemsize = jnp.dtype(pr.dtype).itemsize

    # gt stays in its native integer width (widened in-register in the kernel).
    t = gt if jnp.issubdtype(gt.dtype, jnp.integer) else gt.astype(jnp.int32)

    x = pr.reshape(n, c, hw)
    t = t.reshape(n, 1, hw)

    # Only pad when HW is not a multiple of 128 (common segmentation shapes
    # never hit this).  TODO(synk): this corner case costs one extra HBM pass.
    hw_pad = pl.cdiv(hw, lane) * lane
    if hw_pad != hw:
        x = jnp.pad(x, ((0, 0), (0, 0), (0, hw_pad - hw)))
        t = jnp.pad(t, ((0, 0), (0, 0), (0, hw_pad - hw)))
    sub = hw_pad // lane

    # Free reshapes into the sublane-packed 4-D layout.
    x = x.reshape(n, c, sub, lane)
    t = t.reshape(n, 1, sub, lane)

    # Sublane tile: aim for ~target_block_bytes per logits block, multiple of
    # 8 sublanes, capped to bound f32 intermediates in VMEM.  Small images
    # take the whole (possibly non-multiple-of-8) sub axis as one full block.
    sub_t = target_block_bytes // max(1, c * lane * itemsize)
    sub_t = max(8, min(4096, (sub_t // 8) * 8))
    if sub <= sub_t:
        sub_t = sub
    n_blk = pl.cdiv(sub, sub_t)

    # 2-way core split only where it buys real parallelism (v7x: 2 TCs).
    parts = _num_parallel_cores()
    if n_blk < parts:
        parts = 1
    blk_per_part = pl.cdiv(n_blk, parts)

    kernel = functools.partial(_focal_ce_kernel, hw=hw, sub_t=sub_t,
                               blk_per_part=blk_per_part, n_blk=n_blk)

    def data_map(p, i, j):
        # Clamp so over-range blocks of the last part DMA a valid (masked) tile.
        return (i, 0, jnp.minimum(p * blk_per_part + j, n_blk - 1), 0)

    partial_sums = pl.pallas_call(
        kernel,
        out_shape=jax.ShapeDtypeStruct((parts, sub_t, lane), jnp.float32),
        grid_spec=pltpu.PrefetchScalarGridSpec(
            num_scalar_prefetch=0,
            grid=(parts, n, blk_per_part),
            in_specs=[
                pl.BlockSpec((1, c, sub_t, lane), data_map),
                pl.BlockSpec((1, 1, sub_t, lane), data_map),
            ],
            out_specs=pl.BlockSpec((1, sub_t, lane), lambda p, i, j: (p, 0, 0)),
            scratch_shapes=[pltpu.VMEM((sub_t, lane), jnp.float32)],
        ),
        compiler_params=pltpu.CompilerParams(
            dimension_semantics=("parallel", "arbitrary", "arbitrary"),
            vmem_limit_bytes=32 * 1024 * 1024),
    )(x, t)

    # Tiny scalar epilogue in plain JAX: combine per-part/per-lane partials.
    mean_ce = jnp.sum(partial_sums) / jnp.float32(n * hw)
    log_pt = -mean_ce
    pt = jnp.exp(log_pt)
    one_minus_pt = 1.0 - pt
    g = float(gamma)
    if g == int(g) and 0 <= int(g) <= 4:
        focal = jnp.float32(1.0)
        for _ in range(int(g)):                    # integer power -> multiplies
            focal = focal * one_minus_pt
    else:
        focal = one_minus_pt ** g
    return -focal * jnp.float32(alpha) * log_pt


# TODO(synk): nn.CrossEntropyLoss(weight=...) per-class weights / ignore_index
# are not implemented (the module's default weight=None path is reproduced).


def _reference_focal(pr, gt, alpha=0.5, gamma=2):
    n, c, h, w = pr.shape
    logits = jnp.transpose(pr, (0, 2, 3, 1)).reshape(-1, c).astype(jnp.float32)
    t = gt.reshape(-1).astype(jnp.int32)
    lse = jax.scipy.special.logsumexp(logits, axis=-1)
    picked = jnp.take_along_axis(logits, t[:, None], axis=-1)[:, 0]
    ce = jnp.mean(lse - picked)
    log_pt = -ce
    pt = jnp.exp(log_pt)
    return -((1.0 - pt) ** gamma) * alpha * log_pt


if __name__ == "__main__":
    key = jax.random.PRNGKey(0)
    k_pr, k_gt = jax.random.split(key)

    N, C, H, W = 2, 4, 16, 16
    pr = jax.random.normal(k_pr, (N, C, H, W), dtype=jnp.float32)
    gt = jax.random.randint(k_gt, (N, H, W), 0, C, dtype=jnp.int32)

    loss = focal_loss(pr, gt, alpha=0.5, gamma=2)
    loss = jax.block_until_ready(loss)

    ref = _reference_focal(pr, gt, alpha=0.5, gamma=2)
    assert jnp.allclose(loss, ref, rtol=1e-5, atol=1e-5), (loss, ref)

    print("KERNEL_OK")
</pallas_src>

<mosaic_0001>
module attributes {stable_mosaic.version = 11 : i64} {
  func.func @_focal_ce_kernel(%arg0: i32, %arg1: i32, %arg2: i32, %arg3: memref<1x4x2x128xf32, #tpu.memory_space<vmem>>, %arg4: memref<1x1x2x128xi32, #tpu.memory_space<vmem>>, %arg5: memref<1x2x128xf32, #tpu.memory_space<vmem>>, %arg6: memref<2x128xf32, #tpu.memory_space<vmem>>) attributes {dimension_semantics = [#tpu.dimension_semantics<parallel>, #tpu.dimension_semantics<arbitrary>, #tpu.dimension_semantics<arbitrary>], iteration_bounds = array<i64: 1, 2, 1>, scalar_prefetch = 0 : i64, scratch_operands = 1 : i64, tpu.core_type = #tpu.core_type<tc>, window_params = [{transform_indices = @transform_0, window_bounds = array<i64: 1, 4, 2, 128>}, {transform_indices = @transform_1, window_bounds = array<i64: 1, 1, 2, 128>}, {transform_indices = @transform_2, window_bounds = array<i64: 1, 2, 128>}]} {
    %c0_i32 = arith.constant 0 : i32
    %0 = arith.cmpi eq, %arg1, %c0_i32 : i32
    %c0_i32_0 = arith.constant 0 : i32
    %1 = arith.cmpi eq, %arg2, %c0_i32_0 : i32
    %2 = arith.andi %0, %1 : i1
    %3 = arith.extui %2 : i1 to i32
    %c0_i32_1 = arith.constant 0 : i32
    %4 = arith.cmpi ne, %3, %c0_i32_1 : i32
    scf.if %4 {
      %cst_48 = arith.constant 0.000000e+00 : f32
      %76 = vector.broadcast %cst_48 : f32 to vector<2x128xf32>
      %c0_49 = arith.constant 0 : index
      %c0_50 = arith.constant 0 : index
      %77 = vector.load %arg6[%c0_49, %c0_50] : memref<2x128xf32, #tpu.memory_space<vmem>>, vector<2x128xf32>
      tpu.vector_store %arg6[%c0_49, %c0_50], %76 {strides = array<i32>} : memref<2x128xf32, #tpu.memory_space<vmem>>, vector<2x128xf32>,
    } else {
    }
    %c0 = arith.constant 0 : index
    %c0_2 = arith.constant 0 : index
    %c0_3 = arith.constant 0 : index
    %c0_4 = arith.constant 0 : index
    %5 = vector.load %arg4[%c0, %c0_2, %c0_3, %c0_4] : memref<1x1x2x128xi32, #tpu.memory_space<vmem>>, vector<1x1x2x128xi32>
    %6 = vector.shape_cast %5 : vector<1x1x2x128xi32> to vector<2x128xi32>
    %c0_5 = arith.constant 0 : index
    %c0_6 = arith.constant 0 : index
    %c0_7 = arith.constant 0 : index
    %c0_8 = arith.constant 0 : index
    %7 = vector.load %arg3[%c0_5, %c0_6, %c0_7, %c0_8] : memref<1x4x2x128xf32, #tpu.memory_space<vmem>>, vector<1x1x2x128xf32>
    %8 = vector.shape_cast %7 : vector<1x1x2x128xf32> to vector<2x128xf32>
    %c0_9 = arith.constant 0 : index
    %c1 = arith.constant 1 : index
    %c0_10 = arith.constant 0 : index
    %c0_11 = arith.constant 0 : index
    %9 = vector.load %arg3[%c0_9, %c1, %c0_10, %c0_11] : memref<1x4x2x128xf32, #tpu.memory_space<vmem>>, vector<1x1x2x128xf32>
    %10 = vector.shape_cast %9 : vector<1x1x2x128xf32> to vector<2x128xf32>
    %11 = arith.maximumf %8, %10 : vector<2x128xf32>
    %c0_12 = arith.constant 0 : index
    %c2 = arith.constant 2 : index
    %c0_13 = arith.constant 0 : index
    %c0_14 = arith.constant 0 : index
    %12 = vector.load %arg3[%c0_12, %c2, %c0_13, %c0_14] : memref<1x4x2x128xf32, #tpu.memory_space<vmem>>, vector<1x1x2x128xf32>
    %13 = vector.shape_cast %12 : vector<1x1x2x128xf32> to vector<2x128xf32>
    %14 = arith.maximumf %11, %13 : vector<2x128xf32>
    %c0_15 = arith.constant 0 : index
    %c3 = arith.constant 3 : index
    %c0_16 = arith.constant 0 : index
    %c0_17 = arith.constant 0 : index
    %15 = vector.load %arg3[%c0_15, %c3, %c0_16, %c0_17] : memref<1x4x2x128xf32, #tpu.memory_space<vmem>>, vector<1x1x2x128xf32>
    %16 = vector.shape_cast %15 : vector<1x1x2x128xf32> to vector<2x128xf32>
    %17 = arith.maximumf %14, %16 : vector<2x128xf32>
    %cst = arith.constant 0.000000e+00 : f32
    %18 = vector.broadcast %cst : f32 to vector<2x128xf32>
    %cst_18 = arith.constant 0.000000e+00 : f32
    %19 = vector.broadcast %cst_18 : f32 to vector<2x128xf32>
    %c0_19 = arith.constant 0 : index
    %c0_20 = arith.constant 0 : index
    %c0_21 = arith.constant 0 : index
    %c0_22 = arith.constant 0 : index
    %20 = vector.load %arg3[%c0_19, %c0_20, %c0_21, %c0_22] : memref<1x4x2x128xf32, #tpu.memory_space<vmem>>, vector<1x1x2x128xf32>
    %21 = vector.shape_cast %20 : vector<1x1x2x128xf32> to vector<2x128xf32>
    %22 = arith.subf %21, %17 : vector<2x128xf32>
    %23 = math.exp %22 : vector<2x128xf32>
    %24 = arith.addf %18, %23 : vector<2x128xf32>
    %c0_i32_23 = arith.constant 0 : i32
    %25 = vector.broadcast %c0_i32_23 : i32 to vector<2x128xi32>
    %26 = arith.cmpi eq, %6, %25 : vector<2x128xi32>
    %cst_24 = arith.constant 0.000000e+00 : f32
    %27 = vector.broadcast %cst_24 : f32 to vector<2x128xf32>
    %28 = arith.select %26, %21, %27 : vector<2x128xi1>, vector<2x128xf32>
    %29 = arith.addf %19, %28 : vector<2x128xf32>
    %c0_25 = arith.constant 0 : index
    %c1_26 = arith.constant 1 : index
    %c0_27 = arith.constant 0 : index
    %c0_28 = arith.constant 0 : index
    %30 = vector.load %arg3[%c0_25, %c1_26, %c0_27, %c0_28] : memref<1x4x2x128xf32, #tpu.memory_space<vmem>>, vector<1x1x2x128xf32>
    %31 = vector.shape_cast %30 : vector<1x1x2x128xf32> to vector<2x128xf32>
    %32 = arith.subf %31, %17 : vector<2x128xf32>
    %33 = math.exp %32 : vector<2x128xf32>
    %34 = arith.addf %24, %33 : vector<2x128xf32>
    %c1_i32 = arith.constant 1 : i32
    %35 = vector.broadcast %c1_i32 : i32 to vector<2x128xi32>
    %36 = arith.cmpi eq, %6, %35 : vector<2x128xi32>
    %cst_29 = arith.constant 0.000000e+00 : f32
    %37 = vector.broadcast %cst_29 : f32 to vector<2x128xf32>
    %38 = arith.select %36, %31, %37 : vector<2x128xi1>, vector<2x128xf32>
    %39 = arith.addf %29, %38 : vector<2x128xf32>
    %c0_30 = arith.constant 0 : index
    %c2_31 = arith.constant 2 : index
    %c0_32 = arith.constant 0 : index
    %c0_33 = arith.constant 0 : index
    %40 = vector.load %arg3[%c0_30, %c2_31, %c0_32, %c0_33] : memref<1x4x2x128xf32, #tpu.memory_space<vmem>>, vector<1x1x2x128xf32>
    %41 = vector.shape_cast %40 : vector<1x1x2x128xf32> to vector<2x128xf32>
    %42 = arith.subf %41, %17 : vector<2x128xf32>
    %43 = math.exp %42 : vector<2x128xf32>
    %44 = arith.addf %34, %43 : vector<2x128xf32>
    %c2_i32 = arith.constant 2 : i32
    %45 = vector.broadcast %c2_i32 : i32 to vector<2x128xi32>
    %46 = arith.cmpi eq, %6, %45 : vector<2x128xi32>
    %cst_34 = arith.constant 0.000000e+00 : f32
    %47 = vector.broadcast %cst_34 : f32 to vector<2x128xf32>
    %48 = arith.select %46, %41, %47 : vector<2x128xi1>, vector<2x128xf32>
    %49 = arith.addf %39, %48 : vector<2x128xf32>
    %c0_35 = arith.constant 0 : index
    %c3_36 = arith.constant 3 : index
    %c0_37 = arith.constant 0 : index
    %c0_38 = arith.constant 0 : index
    %50 = vector.load %arg3[%c0_35, %c3_36, %c0_37, %c0_38] : memref<1x4x2x128xf32, #tpu.memory_space<vmem>>, vector<1x1x2x128xf32>
    %51 = vector.shape_cast %50 : vector<1x1x2x128xf32> to vector<2x128xf32>
    %52 = arith.subf %51, %17 : vector<2x128xf32>
    %53 = math.exp %52 : vector<2x128xf32>
    %54 = arith.addf %44, %53 : vector<2x128xf32>
    %c3_i32 = arith.constant 3 : i32
    %55 = vector.broadcast %c3_i32 : i32 to vector<2x128xi32>
    %56 = arith.cmpi eq, %6, %55 : vector<2x128xi32>
    %cst_39 = arith.constant 0.000000e+00 : f32
    %57 = vector.broadcast %cst_39 : f32 to vector<2x128xf32>
    %58 = arith.select %56, %51, %57 : vector<2x128xi1>, vector<2x128xf32>
    %59 = arith.addf %49, %58 : vector<2x128xf32>
    %60 = math.log %54 : vector<2x128xf32>
    %61 = arith.addf %17, %60 : vector<2x128xf32>
    %62 = arith.subf %61, %59 : vector<2x128xf32>
    %c1_i32_40 = arith.constant 1 : i32
    %63 = arith.muli %arg0, %c1_i32_40 : i32
    %64 = arith.addi %63, %arg2 : i32
    %c0_i32_41 = arith.constant 0 : i32
    %65 = arith.cmpi slt, %64, %c0_i32_41 : i32
    %66 = arith.extui %65 : i1 to i32
    %c0_i32_42 = arith.constant 0 : i32
    %67 = arith.cmpi ne, %66, %c0_i32_42 : i32
    scf.if %67 {
      %c0_48 = arith.constant 0 : index
      %c0_49 = arith.constant 0 : index
      %76 = vector.load %arg6[%c0_48, %c0_49] : memref<2x128xf32, #tpu.memory_space<vmem>>, vector<2x128xf32>
      %77 = arith.addf %76, %62 : vector<2x128xf32>
      %c0_50 = arith.constant 0 : index
      %c0_51 = arith.constant 0 : index
      %78 = vector.load %arg6[%c0_50, %c0_51] : memref<2x128xf32, #tpu.memory_space<vmem>>, vector<2x128xf32>
      tpu.vector_store %arg6[%c0_50, %c0_51], %77 {strides = array<i32>} : memref<2x128xf32, #tpu.memory_space<vmem>>, vector<2x128xf32>,
    } else {
    }
    %c0_i32_43 = arith.constant 0 : i32
    %68 = arith.cmpi sge, %64, %c0_i32_43 : i32
    %69 = arith.extui %68 : i1 to i32
    %c0_i32_44 = arith.constant 0 : i32
    %70 = arith.cmpi ne, %69, %c0_i32_44 : i32
    scf.if %70 {
      %76 = tpu.iota {dimensions = array<i32: 0>} : vector<2x128xi32>
      %77 = tpu.iota {dimensions = array<i32: 1>} : vector<2x128xi32>
      %c2_i32_48 = arith.constant 2 : i32
      %78 = arith.muli %64, %c2_i32_48 : i32
      %79 = vector.broadcast %78 : i32 to vector<2x128xi32>
      %80 = arith.addi %79, %76 : vector<2x128xi32>
      %c128_i32 = arith.constant 128 : i32
      %81 = vector.broadcast %c128_i32 : i32 to vector<2x128xi32>
      %82 = arith.muli %80, %81 : vector<2x128xi32>
      %83 = arith.addi %82, %77 : vector<2x128xi32>
      %c0_49 = arith.constant 0 : index
      %c0_50 = arith.constant 0 : index
      %84 = vector.load %arg6[%c0_49, %c0_50] : memref<2x128xf32, #tpu.memory_space<vmem>>, vector<2x128xf32>
      %c256_i32 = arith.constant 256 : i32
      %85 = vector.broadcast %c256_i32 : i32 to vector<2x128xi32>
      %86 = arith.cmpi slt, %83, %85 : vector<2x128xi32>
      %cst_51 = arith.constant 0.000000e+00 : f32
      %87 = vector.broadcast %cst_51 : f32 to vector<2x128xf32>
      %88 = arith.select %86, %62, %87 : vector<2x128xi1>, vector<2x128xf32>
      %89 = arith.addf %84, %88 : vector<2x128xf32>
      %c0_52 = arith.constant 0 : index
      %c0_53 = arith.constant 0 : index
      %90 = vector.load %arg6[%c0_52, %c0_53] : memref<2x128xf32, #tpu.memory_space<vmem>>, vector<2x128xf32>
      tpu.vector_store %arg6[%c0_52, %c0_53], %89 {strides = array<i32>} : memref<2x128xf32, #tpu.memory_space<vmem>>, vector<2x128xf32>,
    } else {
    }
    %c1_i32_45 = arith.constant 1 : i32
    %71 = arith.cmpi eq, %arg1, %c1_i32_45 : i32
    %c0_i32_46 = arith.constant 0 : i32
    %72 = arith.cmpi eq, %arg2, %c0_i32_46 : i32
    %73 = arith.andi %71, %72 : i1
    %74 = arith.extui %73 : i1 to i32
    %c0_i32_47 = arith.constant 0 : i32
    %75 = arith.cmpi ne, %74, %c0_i32_47 : i32
    scf.if %75 {
      %c0_48 = arith.constant 0 : index
      %c0_49 = arith.constant 0 : index
      %76 = vector.load %arg6[%c0_48, %c0_49] : memref<2x128xf32, #tpu.memory_space<vmem>>, vector<2x128xf32>
      %c0_50 = arith.constant 0 : index
      %c0_51 = arith.constant 0 : index
      %c0_52 = arith.constant 0 : index
      %77 = vector.load %arg5[%c0_50, %c0_51, %c0_52] : memref<1x2x128xf32, #tpu.memory_space<vmem>>, vector<1x2x128xf32>
      %78 = vector.shape_cast %77 : vector<1x2x128xf32> to vector<2x128xf32>
      %79 = vector.shape_cast %76 : vector<2x128xf32> to vector<1x2x128xf32>
      tpu.vector_store %arg5[%c0_50, %c0_51, %c0_52], %79 {strides = array<i32>} : memref<1x2x128xf32, #tpu.memory_space<vmem>>, vector<1x2x128xf32>,
    } else {
    }
    return
  }
  func.func @transform_0(%arg0: i32, %arg1: i32, %arg2: i32) -> (i32, i32, i32, i32) {
    %c1_i32 = arith.constant 1 : i32
    %0 = arith.muli %arg0, %c1_i32 : i32
    %1 = arith.addi %0, %arg2 : i32
    %c0_i32 = arith.constant 0 : i32
    %2 = arith.minsi %1, %c0_i32 : i32
    %c0_i32_0 = arith.constant 0 : i32
    %c0_i32_1 = arith.constant 0 : i32
    %c0_i32_2 = arith.constant 0 : i32
    return %arg1, %c0_i32_0, %2, %c0_i32_1 : i32, i32, i32, i32
  }
  func.func @transform_1(%arg0: i32, %arg1: i32, %arg2: i32) -> (i32, i32, i32, i32) {
    %c1_i32 = arith.constant 1 : i32
    %0 = arith.muli %arg0, %c1_i32 : i32
    %1 = arith.addi %0, %arg2 : i32
    %c0_i32 = arith.constant 0 : i32
    %2 = arith.minsi %1, %c0_i32 : i32
    %c0_i32_0 = arith.constant 0 : i32
    %c0_i32_1 = arith.constant 0 : i32
    %c0_i32_2 = arith.constant 0 : i32
    return %arg1, %c0_i32_0, %2, %c0_i32_1 : i32, i32, i32, i32
  }
  func.func @transform_2(%arg0: i32, %arg1: i32, %arg2: i32) -> (i32, i32, i32) {
    %c0_i32 = arith.constant 0 : i32
    %c0_i32_0 = arith.constant 0 : i32
    %c0_i32_1 = arith.constant 0 : i32
    return %arg0, %c0_i32, %c0_i32_0 : i32, i32, i32
  }
}

</mosaic_0001>

<llo_original>
// kernel: tpu_custom_call.1
$region0: #{tpu_custom_call.1}
  #allocation0 [shape = 'u32[]', space=smem, size = 0x4, offset = 0x4, fixed_abs, tag = 'smem constant byte address 0x4 - core index']
  #allocation1 [shape = 'u32[144,128]{1,0:T(1,128)}', space=vmem, size = 0x12000, scoped, tag = 'internal scratch']
  #allocation2 [shape = 'f32[2,128]{1,0:T(2,128)}', space=vmem, size = 0x400, scoped, tag = 'scratch operand']
  %s0 = inlined_call_operand.hbm [shape: f32[2,4,2,128], index: 0, kind: input, shape index: {}]
  %s1 = inlined_call_operand.hbm [shape: s32[2,1,2,128], index: 1, kind: input, shape index: {}]
  %s2 = inlined_call_operand.hbm [shape: f32[1,2,128], index: 2, kind: output, shape index: {}]
  %s3 = sld [smem:[#allocation0]]
  $region65: #{tpu_custom_call.1} parent=0
    _
  %s5 = ssub.s32 1, %s3
  %s6 = scalar_select 0, %s5, %s3
  $region1: #{tpu_custom_call.1} parent=0
    #allocation3 [shape = 'u8[8192]{0}', space=vmem, size = 0x2000, scoped, tag = 'input window, operand 0']
    #allocation4 [shape = 's32[2]{0}', space=sflag, size = 0x8, scoped, tag = 'scoped memory for tpu_custom_call.1']
    #allocation5 [shape = 's32[2]{0}', space=sflag, size = 0x8, scoped, tag = 'scoped memory for tpu_custom_call.1']
    #allocation6 [shape = 'u8[2048]{0}', space=vmem, size = 0x800, scoped, tag = 'input window, operand 1']
    #allocation7 [shape = 's32[2]{0}', space=sflag, size = 0x8, scoped, tag = 'scoped memory for tpu_custom_call.1']
    #allocation8 [shape = 'u8[1024]{0}', space=vmem, size = 0x400, scoped, tag = 'output window, operand 0, single buffered']
    %7 = vsyncpa [#allocation4], 0
    %s8 = scalar_lea.sflag [#allocation4], 1
    %9 = vsyncpa %s8, 0
    %10 = vsyncpa [#allocation7], 0
    %s11 = scalar_lea.sflag [#allocation7], 1
    %12 = vsyncpa %s11, 0
    %13 = vsyncpa [#allocation5], 0
    loop: start=0, step=1, limit=4
    $region2: #{tpu_custom_call.1} parent=1 // loop_pre_header
      _
    $region3: #{tpu_custom_call.1} parent=1 // loop_header
      %s15 = sphi 0, %s19
      %p16 = scmp.ge.s32.totalorder %s15, 4
      %s22 = sphi 0, %s41
      %s23 = sphi 0, %s37
      %s24 = sphi 0, %s33
      %s25 = sphi 0, %s22
      %s26 = sphi 0, %s23
      %s27 = sphi 0, %s24
      %s28 = sphi 0, %s25
      %s29 = sphi 0, %s26
      %s30 = sphi 0, %s27
      %s52 = sphi 0, %s54
      %s55 = sphi 0, %s52
      %s56 = sphi 0, %s55
      %s72 = sphi 0, %s56
      %s86 = sphi 0, %s88
      %s89 = sphi 0, %s86
      %s90 = sphi 0, %s89
      %s106 = sphi 0, %s90
      %s112 = sphi 0, %s114
      %s115 = sphi 0, %s112
      %s116 = sphi 0, %s115
      %s132 = sphi 0, %s116
    $region4: #{tpu_custom_call.1} parent=1 // loop_header_branch
      %18 = sbr.rel (%p16) target = $region8
    $region5: #{tpu_custom_call.1} parent=1 // loop_body
      %s20 = ssub.s32 %s15, 1
      %s21 = ssub.s32 %s15, 2
      %s31 = sadd.s32 1, %s24
      %p32 = scmp.ge.s32.totalorder %s31, 1
      %s33 = scalar_select %p32, 0, %s31
      %s34 = sadd.s32 1, %s23
      %s35 = scalar_select %p32, %s34, %s23
      %p36 = scmp.ge.s32.totalorder %s35, 2
      %s37 = scalar_select %p36, 0, %s35
      %s38 = sadd.s32 1, %s22
      %s39 = scalar_select %p36, %s38, %s22
      %p40 = scmp.ge.s32.totalorder %s39, 1
      %s41 = scalar_select %p40, 0, %s39
      %s42 = sadd.s32 %s22, %s24
      %p43 = scmp.lt.s32.totalorder %s42, 0
      %s44 = scalar_select %p43, %s42, 0
      %s45 = sadd.s32 %s41, %s33
      %p46 = scmp.lt.s32.totalorder %s45, 0
      %s47 = scalar_select %p46, %s45, 0
      %s48 = ssub.s32 %s23, %s37
      %s49 = ssub.s32 %s44, %s47
      %s50 = sor.u32 %s48, %s49
      %p51 = scmp.eq.s32.totalorder %s50, 0
      %s53 = sadd.s32 %s52, 1
      %s54 = scalar_select %p51, %s52, %s53
      %p57 = pneg %p51
      %p58 = scmp.eq.s32.totalorder %s15, 1
      %p59 = por %p57, %p58
      %p60 = scmp.ne.s32.totalorder %s52, %s55
      %p61 = scmp.eq.s32.totalorder %s15, 0
      %p62 = por %p60, %p61
      %p63 = scmp.ne.s32.totalorder %s52, %s55
      %p64 = scmp.eq.s32.totalorder %s20, 1
      %p65 = por %p63, %p64
      %p66 = scmp.ne.s32.totalorder %s55, %s56
      %p67 = scmp.eq.s32.totalorder %s20, 0
      %p68 = por %p66, %p67
      %p69 = scmp.ne.s32.totalorder %s55, %s56
      %p70 = scmp.eq.s32.totalorder %s21, 1
      %p71 = por %p69, %p70
      %p73 = scmp.ne.s32.totalorder %s56, %s72
      %p74 = scmp.eq.s32.totalorder %s21, 0
      %p75 = por %p73, %p74
      %s76 = sadd.s32 %s22, %s24
      %p77 = scmp.lt.s32.totalorder %s76, 0
      %s78 = scalar_select %p77, %s76, 0
      %s79 = sadd.s32 %s41, %s33
      %p80 = scmp.lt.s32.totalorder %s79, 0
      %s81 = scalar_select %p80, %s79, 0
      %s82 = ssub.s32 %s23, %s37
      %s83 = ssub.s32 %s78, %s81
      %s84 = sor.u32 %s82, %s83
      %p85 = scmp.eq.s32.totalorder %s84, 0
      %s87 = sadd.s32 %s86, 1
      %s88 = scalar_select %p85, %s86, %s87
      %p91 = pneg %p85
      %p92 = scmp.eq.s32.totalorder %s15, 1
      %p93 = por %p91, %p92
      %p94 = scmp.ne.s32.totalorder %s86, %s89
      %p95 = scmp.eq.s32.totalorder %s15, 0
      %p96 = por %p94, %p95
      %p97 = scmp.ne.s32.totalorder %s86, %s89
      %p98 = scmp.eq.s32.totalorder %s20, 1
      %p99 = por %p97, %p98
      %p100 = scmp.ne.s32.totalorder %s89, %s90
      %p101 = scmp.eq.s32.totalorder %s20, 0
      %p102 = por %p100, %p101
      %p103 = scmp.ne.s32.totalorder %s89, %s90
      %p104 = scmp.eq.s32.totalorder %s21, 1
      %p105 = por %p103, %p104
      %p107 = scmp.ne.s32.totalorder %s90, %s106
      %p108 = scmp.eq.s32.totalorder %s21, 0
      %p109 = por %p107, %p108
      %s110 = ssub.s32 %s22, %s41
      %p111 = scmp.eq.s32.totalorder %s110, 0
      %s113 = sadd.s32 %s112, 1
      %s114 = scalar_select %p111, %s112, %s113
      %p117 = pneg %p111
      %p118 = scmp.eq.s32.totalorder %s15, 1
      %p119 = por %p117, %p118
      %p120 = scmp.ne.s32.totalorder %s112, %s115
      %p121 = scmp.eq.s32.totalorder %s15, 0
      %p122 = por %p120, %p121
      %p123 = scmp.ne.s32.totalorder %s112, %s115
      %p124 = scmp.eq.s32.totalorder %s20, 1
      %p125 = por %p123, %p124
      %p126 = scmp.ne.s32.totalorder %s115, %s116
      %p127 = scmp.eq.s32.totalorder %s20, 0
      %p128 = por %p126, %p127
      %p129 = scmp.ne.s32.totalorder %s115, %s116
      %p130 = scmp.eq.s32.totalorder %s21, 1
      %p131 = por %p129, %p130
      %p133 = scmp.ne.s32.totalorder %s116, %s132
      %p134 = scmp.eq.s32.totalorder %s21, 0
      %p135 = por %p133, %p134
      %p136 = scmp.le.s32.totalorder 1, %s15
      %p137 = scmp.lt.s32.totalorder %s15, 3
      %p138 = pnand %p136, %p137
      %p139 = pneg %p138
      // Predicated region
      $region9: #{tpu_custom_call.1} parent=5 // pred_check
        _
      $region10: #{tpu_custom_call.1} parent=5 // pred_check_branch
        %141 = sbr.rel (%p138) target = $region12
      $region11: #{tpu_custom_call.1} parent=5 // pred_region
        %s142 = ssub.s32 %s15, 1
      $region12: #{tpu_custom_call.1} parent=5 // pred_fallthru
        _
      %p143 = scmp.lt.s32.totalorder %s15, 2
      // Predicated region
      $region13: #{tpu_custom_call.1} parent=5 // pred_check
        %p144 = pneg %p143
      $region14: #{tpu_custom_call.1} parent=5 // pred_check_branch
        %146 = sbr.rel (%p144) target = $region16
      $region15: #{tpu_custom_call.1} parent=5 // pred_region
        // Predicated region
        $region17: #{tpu_custom_call.1} parent=15 // pred_check
          %p147 = pneg %p62
        $region18: #{tpu_custom_call.1} parent=15 // pred_check_branch
          %149 = sbr.rel (%p147) target = $region20
        $region19: #{tpu_custom_call.1} parent=15 // pred_region
          %s150 = sand.u32 %s52, 1
          %s151 = scalar_lea.sflag [#allocation4], %s150
          %s152 = sand.u32 %s52, 1
          %s153 = smul.addr %s152, 8
          %s154 = scalar_lea.vmem [#allocation3], %s153
          %s155 = sadd.s32 %s22, %s24
          %p156 = scmp.lt.s32.totalorder %s155, 0
          %s157 = scalar_select %p156, %s155, 0
          %s159 = ssub.s32 128, 128
          %160 = vsyncadd %s151, %s159
          %s161 = smul.addr %s23, 4
          %s162 = sadd.s32 %s157, %s161
          %s163 = smul.addr %s162, 32
          %s164 = scalar_lea.hbm %s0, %s163
          %s165 = sshll.u32 %s154, 4
          %s166 = int_to_ptr.vmem [resolvable:$true] %s165
          %171 = dma.hbm_to_vmem [thread:$0]  %s164, 128, %s166, %s151, 32, 32, 2
        $region20: #{tpu_custom_call.1} parent=15 // pred_fallthru
          _
        // Predicated region
        $region21: #{tpu_custom_call.1} parent=15 // pred_check
          %p172 = pneg %p96
        $region22: #{tpu_custom_call.1} parent=15 // pred_check_branch
          %174 = sbr.rel (%p172) target = $region24
        $region23: #{tpu_custom_call.1} parent=15 // pred_region
          %s175 = sand.u32 %s86, 1
          %s176 = scalar_lea.sflag [#allocation7], %s175
          %s177 = sand.u32 %s86, 1
          %s178 = smul.addr %s177, 2
          %s179 = scalar_lea.vmem [#allocation6], %s178
          %s180 = sadd.s32 %s22, %s24
          %p181 = scmp.lt.s32.totalorder %s180, 0
          %s182 = scalar_select %p181, %s180, 0
          %s184 = ssub.s32 32, 32
          %185 = vsyncadd %s176, %s184
          %s186 = sadd.s32 %s182, %s23
          %s187 = smul.addr %s186, 32
          %s188 = scalar_lea.hbm %s1, %s187
          %s190 = sshll.u32 %s179, 4
          %s191 = int_to_ptr.vmem [resolvable:$true] %s190
          %193 = dma.hbm_to_vmem [thread:$0]  %s188, 32, %s191, %s176
        $region24: #{tpu_custom_call.1} parent=15 // pred_fallthru
          _
      $region16: #{tpu_custom_call.1} parent=5 // pred_fallthru
        _
      %p194 = scmp.le.s32.totalorder 1, %s15
      %p195 = scmp.lt.s32.totalorder %s15, 3
      %p196 = pnand %p194, %p195
      %p197 = pneg %p196
      // Predicated region
      $region25: #{tpu_custom_call.1} parent=5 // pred_check
        _
      $region26: #{tpu_custom_call.1} parent=5 // pred_check_branch
        %199 = sbr.rel (%p196) target = $region28
      $region27: #{tpu_custom_call.1} parent=5 // pred_region
        %s200 = ssub.s32 %s15, 1
        %s201 = sand.u32 %s55, 1
        %s202 = scalar_lea.sflag [#allocation4], %s201
        %s203 = sand.u32 %s55, 1
        %s204 = smul.addr %s203, 8
        %s205 = scalar_lea.vmem [#allocation3], %s204
        // Predicated region
        $region29: #{tpu_custom_call.1} parent=27 // pred_check
          %p206 = pneg %p68
        $region30: #{tpu_custom_call.1} parent=27 // pred_check_branch
          %208 = sbr.rel (%p206) target = $region32
        $region31: #{tpu_custom_call.1} parent=27 // pred_region
          %209 = dma.done %s202, 128
        $region32: #{tpu_custom_call.1} parent=27 // pred_fallthru
          _
        %s210 = sand.u32 %s89, 1
        %s211 = scalar_lea.sflag [#allocation7], %s210
        %s212 = sand.u32 %s89, 1
        %s213 = smul.addr %s212, 2
        %s214 = scalar_lea.vmem [#allocation6], %s213
        // Predicated region
        $region33: #{tpu_custom_call.1} parent=27 // pred_check
          %p215 = pneg %p102
        $region34: #{tpu_custom_call.1} parent=27 // pred_check_branch
          %217 = sbr.rel (%p215) target = $region36
        $region35: #{tpu_custom_call.1} parent=27 // pred_region
          %218 = dma.done %s211, 32
        $region36: #{tpu_custom_call.1} parent=27 // pred_fallthru
          _
        %s219 = sand.u32 %s55, 1
        %s220 = scalar_lea.sflag [#allocation4], %s219
        %s221 = sand.u32 %s55, 1
        %s222 = smul.addr %s221, 8
        %s223 = scalar_lea.vmem [#allocation3], %s222
        %p224 = pneg %p68
        %p225 = pneg %p65
        %s226 = sand.u32 %s89, 1
        %s227 = scalar_lea.sflag [#allocation7], %s226
        %s228 = sand.u32 %s89, 1
        %s229 = smul.addr %s228, 2
        %s230 = scalar_lea.vmem [#allocation6], %s229
        %p231 = pneg %p102
        %p232 = pneg %p99
        %p233 = pneg %p128
        %p234 = pneg %p125
        %s235 = sadd.s32 %s25, %s27
        %p236 = scmp.lt.s32.totalorder %s235, 0
        %s237 = scalar_select %p236, %s235, 0
        %s238 = sadd.s32 %s25, %s27
        %p239 = scmp.lt.s32.totalorder %s238, 0
        %s240 = scalar_select %p239, %s238, 0
        %p241 = scmp.eq.s32.totalorder %s26, 0
        %p242 = scmp.eq.s32.totalorder %s27, 0
        %p243 = pnand %p241, %p242
        %p244 = pneg %p243
        // Predicated region
        $region37: #{tpu_custom_call.1} parent=27 // pred_check
          _
        $region38: #{tpu_custom_call.1} parent=27 // pred_check_branch
          %246 = sbr.rel (%p243) target = $region40
        $region39: #{tpu_custom_call.1} parent=27 // pred_region
          %247 = vst [vmem:[#allocation2] sm:$0x3] 0.0
        $region40: #{tpu_custom_call.1} parent=27 // pred_fallthru
          _
        %v248 = vld [vmem:[%s214] sm:$0x3]
        %v249 = vld [vmem:[%s205] sm:$0x3]
        %s250 = scalar_lea.vmem %s205, 2 [#allocation3]
        %v251 = vld [vmem:[%s250] sm:$0x3]
        %v252 = vmax.f32 %v249, %v251
        %s253 = scalar_lea.vmem %s205, 4 [#allocation3]
        %v254 = vld [vmem:[%s253] sm:$0x3]
        %v255 = vmax.f32 %v252, %v254
        %s256 = scalar_lea.vmem %s205, 6 [#allocation3]
        %v257 = vld [vmem:[%s256] sm:$0x3]
        %v258 = vmax.f32 %v255, %v257
        %v259 = vsub.f32 %v249, %v258
        %v260 = vmul.f32 %v259, 1.442695
        %v261 = vpow.pop %v260
        %v262 = vadd.f32 %v261, 0.0
        %vm263 = vcmp.eq.s32.totalorder %v248, 0
        %v264 = vsel %vm263, %v249, 0.0
        %v265 = vadd.f32 %v264, 0.0
        %v266 = vsub.f32 %v251, %v258
        %v267 = vmul.f32 %v266, 1.442695
        %v268 = vpow.pop %v267
        %v269 = vadd.f32 %v262, %v268
        %vm270 = vcmp.eq.s32.totalorder %v248, 1
        %v271 = vsel %vm270, %v251, 0.0
        %v272 = vadd.f32 %v265, %v271
        %v273 = vsub.f32 %v254, %v258
        %v274 = vmul.f32 %v273, 1.442695
        %v275 = vpow.pop %v274
        %v276 = vadd.f32 %v269, %v275
        %vm277 = vcmp.eq.s32.totalorder %v248, 2
        %v278 = vsel %vm277, %v254, 0.0
        %v279 = vadd.f32 %v272, %v278
        %v280 = vsub.f32 %v257, %v258
        %v281 = vmul.f32 %v280, 1.442695
        %v282 = vpow.pop %v281
        %v283 = vadd.f32 %v276, %v282
        %vm284 = vcmp.eq.s32.totalorder %v248, 3
        %v285 = vsel %vm284, %v257, 0.0
        %v286 = vadd.f32 %v279, %v285
        %v287 = vlog2.pop %v283
        %v288 = vmul.f32 %v287, 0.6931472
        %v289 = vadd.f32 %v258, %v288
        %v290 = vsub.f32 %v289, %v286
        %s291 = sadd.s32 %s25, %s27
        %p292 = scmp.lt.s32.totalorder %s291, 0
        // Predicated region
        $region41: #{tpu_custom_call.1} parent=27 // pred_check
          %p293 = pneg %p292
        $region42: #{tpu_custom_call.1} parent=27 // pred_check_branch
          %295 = sbr.rel (%p293) target = $region44
        $region43: #{tpu_custom_call.1} parent=27 // pred_region
          %v296 = vld [vmem:[#allocation2] sm:$0x3]
          %v297 = vadd.f32 %v296, %v290
          %298 = vst [vmem:[#allocation2] sm:$0x3] %v297
        $region44: #{tpu_custom_call.1} parent=27 // pred_fallthru
          _
        %p299 = scmp.ge.s32.totalorder %s291, 0
        // Predicated region
        $region45: #{tpu_custom_call.1} parent=27 // pred_check
          %p300 = pneg %p299
        $region46: #{tpu_custom_call.1} parent=27 // pred_check_branch
          %302 = sbr.rel (%p300) target = $region48
        $region47: #{tpu_custom_call.1} parent=27 // pred_region
          %v303 = vlaneseq
          %v304 = vshrl.u32 %v303, 7
          %v305 = vlaneseq
          %v306 = vand.u32 %v305, 127
          %s307 = smul.u32 %s291, 2
          %v308 = vstv %s307
          %v309 = vadd.s32 %v308, %v304
          %v310 = vmul.u32 %v309, 128
          %v311 = vadd.s32 %v310, %v306
          %v312 = vld [vmem:[#allocation2] sm:$0x3]
          %vm313 = vcmp.lt.s32.totalorder %v311, 256
          %v314 = vsel %vm313, %v290, 0.0
          %v315 = vadd.f32 %v312, %v314
          %316 = vst [vmem:[#allocation2] sm:$0x3] %v315
        $region48: #{tpu_custom_call.1} parent=27 // pred_fallthru
          _
        %p317 = scmp.eq.s32.totalorder %s26, 1
        %p318 = pnand %p317, %p242
        %p319 = pneg %p318
        // Predicated region
        $region49: #{tpu_custom_call.1} parent=27 // pred_check
          _
        $region50: #{tpu_custom_call.1} parent=27 // pred_check_branch
          %321 = sbr.rel (%p318) target = $region52
        $region51: #{tpu_custom_call.1} parent=27 // pred_region
          %v322 = vld [vmem:[#allocation2] sm:$0x3]
          %323 = vst [vmem:[#allocation8] sm:$0x3] %v322
        $region52: #{tpu_custom_call.1} parent=27 // pred_fallthru
          _
        // Predicated region
        $region53: #{tpu_custom_call.1} parent=27 // pred_check
          %p324 = pneg %p125
        $region54: #{tpu_custom_call.1} parent=27 // pred_check_branch
          %326 = sbr.rel (%p324) target = $region56
        $region55: #{tpu_custom_call.1} parent=27 // pred_region
          %s328 = ssub.s32 32, 32
          %329 = vsyncadd [#allocation5], %s328
          %s330 = smul.addr %s25, 32
          %s331 = scalar_lea.hbm %s2, %s330
          %s333 = sshll.u32 [#allocation8], 4
          %s334 = int_to_ptr.vmem [resolvable:$true] %s333
          %336 = dma.vmem_to_hbm [thread:$0]  %s334, 32, %s331, [#allocation5]
        $region56: #{tpu_custom_call.1} parent=27 // pred_fallthru
          _
        // Predicated region
        $region57: #{tpu_custom_call.1} parent=27 // pred_check
          %p337 = pneg %p125
        $region58: #{tpu_custom_call.1} parent=27 // pred_check_branch
          %339 = sbr.rel (%p337) target = $region60
        $region59: #{tpu_custom_call.1} parent=27 // pred_region
          %340 = dma.done [#allocation5], 32
        $region60: #{tpu_custom_call.1} parent=27 // pred_fallthru
          _
      $region28: #{tpu_custom_call.1} parent=5 // pred_fallthru
        _
      %p341 = scmp.le.s32.totalorder 2, %s15
      // Predicated region
      $region61: #{tpu_custom_call.1} parent=5 // pred_check
        %p342 = pneg %p341
      $region62: #{tpu_custom_call.1} parent=5 // pred_check_branch
        %344 = sbr.rel (%p342) target = $region64
      $region63: #{tpu_custom_call.1} parent=5 // pred_region
        %s345 = ssub.s32 %s15, 2
      $region64: #{tpu_custom_call.1} parent=5 // pred_fallthru
        _
    $region6: #{tpu_custom_call.1} parent=1 // loop_footer
      %s19 = sadd.s32 1, %s15
    $region7: #{tpu_custom_call.1} parent=1 // loop_footer_branch
      %14 = sbr.rel target = $region3
    $region8: #{tpu_custom_call.1} parent=1 // loop_exit
      _
    %346 = vsyncpa [#allocation4], 1
    %s347 = scalar_lea.sflag [#allocation4], 1
    %348 = vsyncpa %s347, 1
    %349 = vsyncpa [#allocation7], 1
    %s350 = scalar_lea.sflag [#allocation7], 1
    %351 = vsyncpa %s350, 1
    %352 = vsyncpa [#allocation5], 1
    %s353 = scalar_lea.sflag [#allocation5], 1
    %354 = vsyncpa %s353, 1

</llo_original>
